<compile_context>
chip_gen: v7x
topology: tpu7x:2x2x1
jax: 0.10.0
libtpu: 0.0.40
codegen_flags: <defaults>
</compile_context>

<pallas_src>
import functools

import jax
import jax.numpy as jnp
from jax.experimental import pallas as pl
from jax.experimental.pallas import tpu as pltpu


# ----------------------------------------------------------------------------
# Kernel
# ----------------------------------------------------------------------------
def _elu(h):
    # ELU(alpha=1). Both branches of `where` are evaluated; clamp the exp arg
    # so the unselected branch cannot overflow.
    return jnp.where(h > 0.0, h, jnp.exp(jnp.minimum(h, 0.0)) - 1.0)


def _make_kernel(num_residual_blocks):
    R = num_residual_blocks

    def kernel(*refs):
        # refs = (x, w0, b_hid, [w_res], w_out, b_out, out)
        # Activations are feature-major: (features, block_batch).
        x_ref, w0_ref, bhid_ref = refs[0], refs[1], refs[2]
        if R > 0:
            wres_ref, wout_ref, bout_ref = refs[3], refs[4], refs[5]
        else:
            wout_ref, bout_ref = refs[3], refs[4]
        out_ref = refs[-1]

        # Matmul feed dtype follows the (pre-cast) weights; accumulation is f32.
        wdt = w0_ref.dtype

        def mm(w, a):
            a = a.astype(wdt) if a.dtype != wdt else a
            return jnp.dot(w, a, preferred_element_type=jnp.float32)

        x = x_ref[...]                                   # (n, bb)
        b_all = bhid_ref[...].astype(jnp.float32)        # (hidden, 2R+1), one load

        # Input linear: n -> hidden.  w0 is (hidden, n): PyTorch layout, no .T.
        h = mm(w0_ref[...], x) + b_all[:, 0:1]           # (hidden, bb), f32

        # Residual blocks: h + Wb @ ELU(Wa @ h + ba) + bb   (static unroll)
        for r in range(R):
            wa = wres_ref[2 * r]                         # (hidden, hidden)
            wb = wres_ref[2 * r + 1]
            ba = b_all[:, 1 + 2 * r: 2 + 2 * r]          # (hidden, 1), static slice
            bb = b_all[:, 2 + 2 * r: 3 + 2 * r]
            z = mm(wa, h) + ba
            z = _elu(z)
            z = mm(wb, z) + bb
            h = h + z

        # Output linear: hidden -> n.
        out = mm(wout_ref[...], h) + bout_ref[...].astype(jnp.float32)
        out_ref[...] = out.astype(out_ref.dtype)         # (n, bb): lanes = batch

    return kernel


# ----------------------------------------------------------------------------
# Parameter packing (done ONCE, not per forward call)
# ----------------------------------------------------------------------------
def pack_params(params, num_residual_blocks, weight_dtype=jnp.float32):
    """Pack PyTorch-layout (W, b) pairs into the tensors the kernel consumes.

    params = [(W0,b0), (Wa_0,ba_0), (Wb_0,bb_0), ..., (Wout,bout)]
    Returns (w0, b_hid, w_res, w_out, b_out)   [w_res omitted if R == 0]
      w0    : (hidden, n)            weight_dtype
      b_hid : (hidden, 2R+1)         f32, columns [b0, ba_0, bb_0, ba_1, ...]
      w_res : (2R, hidden, hidden)   weight_dtype, [Wa_0, Wb_0, Wa_1, Wb_1, ...]
      w_out : (n, hidden)            weight_dtype
      b_out : (n, 1)                 f32
    """
    R = num_residual_blocks
    assert len(params) == 2 + 2 * R
    w0, b0 = params[0]
    wout, bout = params[-1]
    n = w0.shape[1]

    hidden_biases = [b0]
    res_weights = []
    for r in range(R):
        wa, ba = params[1 + 2 * r]
        wb, bb = params[2 + 2 * r]
        res_weights += [wa, wb]
        hidden_biases += [ba, bb]

    w0 = jnp.asarray(w0, weight_dtype)
    wout = jnp.asarray(wout, weight_dtype)
    b_hid = jnp.stack([jnp.asarray(b, jnp.float32) for b in hidden_biases], axis=1)
    b_out = jnp.asarray(bout, jnp.float32).reshape(n, 1)
    if R > 0:
        w_res = jnp.stack([jnp.asarray(w, weight_dtype) for w in res_weights],
                          axis=0)
        return (w0, b_hid, w_res, wout, b_out)
    return (w0, b_hid, wout, b_out)


# ----------------------------------------------------------------------------
# Build-time helpers (no kernel execution)
# ----------------------------------------------------------------------------
def _default_block_batch(B):
    # Lane-dim tiling rule: a partial block must be a multiple of 128 lanes.
    if B < 256 or B % 128 != 0:
        return B
    # Cap at 512 lanes ((hidden, block_batch) f32 activations -> vreg pressure)
    # and keep >= 2 grid steps so v7x's second TensorCore gets work via the
    # "parallel" grid axis.
    for cand in (512, 384, 256, 128):
        if cand <= B // 2 and B % cand == 0:
            return cand
    return B


@functools.lru_cache(maxsize=1)
def _single_buffered_params_supported():
    """Compile-time probe (never executes a kernel): does this jax accept
    pipeline_mode=pl.Buffered(1) on a grid-invariant BlockSpec?"""
    if not hasattr(pl, "Buffered"):
        return False

    def probe(w_ref, o_ref):
        o_ref[...] = w_ref[...] + 1.0

    try:
        fn = pl.pallas_call(
            probe,
            out_shape=jax.ShapeDtypeStruct((8, 128), jnp.float32),
            grid=(1,),
            in_specs=[pl.BlockSpec((8, 128), lambda i: (0, 0),
                                   pipeline_mode=pl.Buffered(1))],
            out_specs=pl.BlockSpec((8, 128), lambda i: (0, 0)),
        )
        jax.jit(fn).lower(
            jax.ShapeDtypeStruct((8, 128), jnp.float32)).compile()
        return True
    except Exception:  # probe only; the real kernel is never retried/masked
        return False


def _padded_vmem_bytes(shape, itemsize):
    s = list(shape)
    if len(s) == 1:
        s = [1] + s
    s[-1] = -(-s[-1] // 128) * 128
    s[-2] = -(-s[-2] // 8) * 8
    total = int(itemsize)
    for d in s:
        total *= int(d)
    return total


def _vmem_limit_bytes(packed_params, n, hidden, block_batch, single_buffered):
    param_bytes = sum(_padded_vmem_bytes(p.shape, p.dtype.itemsize)
                      for p in packed_params)
    param_bytes *= 1 if single_buffered else 2           # buffer count
    io_bytes = 2 * 2 * _padded_vmem_bytes((n, block_batch), 4)   # x/out, 2-buf
    act_bytes = 4 * _padded_vmem_bytes((hidden, block_batch), 4)  # h/z headroom
    budget = param_bytes + io_bytes + act_bytes + (4 << 20)       # scratch margin
    try:
        physical = int(pltpu.get_tpu_info().vmem_capacity_bytes)
    except Exception:
        physical = 64 << 20     # v7x floor; v5e/v6e have 128 MiB
    return int(min(max(budget, 32 << 20), int(physical * 0.9)))


# ----------------------------------------------------------------------------
# Forward
# ----------------------------------------------------------------------------
def ode_net_forward(t, x, packed_params, *, num_residual_blocks,
                    block_batch=None):
    """Pallas implementation of ODE_Net_NeuralODE.forward(t, x).

    `t` is ignored, matching the PyTorch module.  `packed_params` comes from
    pack_params() (done once per parameter set).
    """
    del t  # unused, as in the PyTorch forward
    B, _ = x.shape
    if block_batch is None:
        block_batch = _default_block_batch(B)
    assert B % block_batch == 0, "block_batch must divide the batch"
    assert block_batch == B or block_batch % 128 == 0, (
        "block_batch must equal B or be a multiple of 128 (lane tiling rule)")
    single_buf = _single_buffered_params_supported()
    return _forward_jit(x, packed_params, int(num_residual_blocks),
                        int(block_batch), bool(single_buf))


@functools.partial(jax.jit, static_argnums=(2, 3, 4))
def _forward_jit(x, packed_params, num_residual_blocks, block_batch,
                 single_buf):
    B, n = x.shape
    hidden = packed_params[0].shape[0]

    # Feature-major activations: lane axis = batch (lane-dense output stores
    # for block_batch >= 128).  The transposes fuse into the jitted program.
    xt = x.T                                             # (n, B)

    def const_spec(shape):
        # Grid-invariant parameter block: constant index_map keeps it resident;
        # single buffering (when supported) drops the pointless 2x VMEM copy.
        if len(shape) == 2:
            idx_map = lambda i: (0, 0)
        else:
            idx_map = lambda i: (0, 0, 0)
        if single_buf:
            return pl.BlockSpec(tuple(shape), idx_map,
                                pipeline_mode=pl.Buffered(1))
        return pl.BlockSpec(tuple(shape), idx_map)

    in_specs = [pl.BlockSpec((n, block_batch), lambda i: (0, i))]
    in_specs += [const_spec(p.shape) for p in packed_params]
    out_spec = pl.BlockSpec((n, block_batch), lambda i: (0, i))

    vmem_limit = _vmem_limit_bytes(packed_params, n, hidden, block_batch,
                                   single_buf)

    out_t = pl.pallas_call(
        _make_kernel(num_residual_blocks),
        out_shape=jax.ShapeDtypeStruct((n, B), x.dtype),
        grid=(B // block_batch,),
        in_specs=in_specs,
        out_specs=out_spec,
        compiler_params=pltpu.CompilerParams(
            dimension_semantics=("parallel",),
            vmem_limit_bytes=vmem_limit),
    )(xt, *packed_params)

    return out_t.T                                       # back to (B, n)


# ----------------------------------------------------------------------------
# Init + pure-JAX reference
# ----------------------------------------------------------------------------
def init_params(key, n, num_residual_blocks, hidden_features):
    """PyTorch-nn.Linear-style init: U(-1/sqrt(fan_in), 1/sqrt(fan_in))."""
    def linear(key, out_f, in_f):
        kw, kb = jax.random.split(key)
        bound = 1.0 / jnp.sqrt(jnp.float32(in_f))
        w = jax.random.uniform(kw, (out_f, in_f), jnp.float32, -bound, bound)
        b = jax.random.uniform(kb, (out_f,), jnp.float32, -bound, bound)
        return w, b

    keys = jax.random.split(key, 2 + 2 * num_residual_blocks)
    params = [linear(keys[0], hidden_features, n)]
    for r in range(num_residual_blocks):
        params.append(linear(keys[1 + 2 * r], hidden_features, hidden_features))
        params.append(linear(keys[2 + 2 * r], hidden_features, hidden_features))
    params.append(linear(keys[-1], n, hidden_features))
    return params


def reference_forward(x, params, num_residual_blocks):
    """Pure-JAX reference reproducing the PyTorch module (batch-major)."""
    w0, b0 = params[0]
    h = x @ w0.T + b0
    idx = 1
    for _ in range(num_residual_blocks):
        wa, ba = params[idx]
        wb, bb = params[idx + 1]
        idx += 2
        z = h @ wa.T + ba
        z = jnp.where(z > 0.0, z, jnp.exp(jnp.minimum(z, 0.0)) - 1.0)
        z = z @ wb.T + bb
        h = h + z
    wo, bo = params[idx]
    return h @ wo.T + bo


# ----------------------------------------------------------------------------
# Demo / self-check
# ----------------------------------------------------------------------------
if __name__ == "__main__":
    # Small, module-consistent shapes.
    n = 4                     # ODE state dimension
    hidden_features = 32      # hidden width
    num_residual_blocks = 2
    B = 8                     # batch of states

    key = jax.random.PRNGKey(0)
    k_param, k_x = jax.random.split(key)
    params = init_params(k_param, n, num_residual_blocks, hidden_features)
    packed = pack_params(params, num_residual_blocks)   # done once, not per call

    x = jax.random.normal(k_x, (B, n), jnp.float32)
    t = jnp.float32(0.0)      # ignored by forward, as in the PyTorch module

    out = ode_net_forward(t, x, packed,
                          num_residual_blocks=num_residual_blocks)
    out = jax.block_until_ready(out)

    ref = reference_forward(x, params, num_residual_blocks)
    assert out.shape == (B, n)
    assert jnp.allclose(out, ref, atol=1e-5, rtol=1e-5), (
        f"mismatch: max abs diff {jnp.max(jnp.abs(out - ref))}"
    )

    print("KERNEL_OK")
</pallas_src>

<mosaic_0001>
module attributes {stable_mosaic.version = 11 : i64} {
  func.func @kernel(%arg0: i32, %arg1: memref<4x8xf32, #tpu.memory_space<vmem>>, %arg2: memref<32x4xf32, #tpu.memory_space<vmem>>, %arg3: memref<32x5xf32, #tpu.memory_space<vmem>>, %arg4: memref<4x32x32xf32, #tpu.memory_space<vmem>>, %arg5: memref<4x32xf32, #tpu.memory_space<vmem>>, %arg6: memref<4x1xf32, #tpu.memory_space<vmem>>, %arg7: memref<4x8xf32, #tpu.memory_space<vmem>>) attributes {dimension_semantics = [#tpu.dimension_semantics<parallel>], iteration_bounds = array<i64: 1>, scalar_prefetch = 0 : i64, scratch_operands = 0 : i64, tpu.core_type = #tpu.core_type<tc>, window_params = [{transform_indices = @transform_0, window_bounds = array<i64: 4, 8>}, {pipeline_mode = #tpu.pipeline_mode<synchronous>, transform_indices = @transform_1, window_bounds = array<i64: 32, 4>}, {pipeline_mode = #tpu.pipeline_mode<synchronous>, transform_indices = @transform_2, window_bounds = array<i64: 32, 5>}, {pipeline_mode = #tpu.pipeline_mode<synchronous>, transform_indices = @transform_3, window_bounds = array<i64: 4, 32, 32>}, {pipeline_mode = #tpu.pipeline_mode<synchronous>, transform_indices = @transform_4, window_bounds = array<i64: 4, 32>}, {pipeline_mode = #tpu.pipeline_mode<synchronous>, transform_indices = @transform_5, window_bounds = array<i64: 4, 1>}, {transform_indices = @transform_6, window_bounds = array<i64: 4, 8>}]} {
    %c0 = arith.constant 0 : index
    %c0_0 = arith.constant 0 : index
    %0 = vector.load %arg1[%c0, %c0_0] : memref<4x8xf32, #tpu.memory_space<vmem>>, vector<4x8xf32>
    %c0_1 = arith.constant 0 : index
    %c0_2 = arith.constant 0 : index
    %1 = vector.load %arg3[%c0_1, %c0_2] : memref<32x5xf32, #tpu.memory_space<vmem>>, vector<32x5xf32>
    %c0_3 = arith.constant 0 : index
    %c0_4 = arith.constant 0 : index
    %2 = vector.load %arg2[%c0_3, %c0_4] : memref<32x4xf32, #tpu.memory_space<vmem>>, vector<32x4xf32>
    %cst = arith.constant dense<0.000000e+00> : vector<32x8xf32>
    %3 = tpu.matmul %2, %0, %cst {dimension_numbers = #tpu.dot_dimension_numbers<[1], [0], [0], [1], [0, 0, 1, 1], [], []>} : vector<32x4xf32>, vector<4x8xf32>, vector<32x8xf32> -> vector<32x8xf32>
    %4 = vector.extract_strided_slice %1 {offsets = [0, 0], sizes = [32, 1], strides = [1, 1]} : vector<32x5xf32> to vector<32x1xf32>
    %5 = vector.broadcast %4 : vector<32x1xf32> to vector<32x8xf32>
    %6 = arith.addf %3, %5 : vector<32x8xf32>
    %c0_5 = arith.constant 0 : index
    %c0_6 = arith.constant 0 : index
    %c0_7 = arith.constant 0 : index
    %7 = vector.load %arg4[%c0_5, %c0_6, %c0_7] : memref<4x32x32xf32, #tpu.memory_space<vmem>>, vector<1x32x32xf32>
    %8 = vector.shape_cast %7 : vector<1x32x32xf32> to vector<32x32xf32>
    %c1 = arith.constant 1 : index
    %c0_8 = arith.constant 0 : index
    %c0_9 = arith.constant 0 : index
    %9 = vector.load %arg4[%c1, %c0_8, %c0_9] : memref<4x32x32xf32, #tpu.memory_space<vmem>>, vector<1x32x32xf32>
    %10 = vector.shape_cast %9 : vector<1x32x32xf32> to vector<32x32xf32>
    %11 = vector.extract_strided_slice %1 {offsets = [0, 1], sizes = [32, 1], strides = [1, 1]} : vector<32x5xf32> to vector<32x1xf32>
    %12 = vector.extract_strided_slice %1 {offsets = [0, 2], sizes = [32, 1], strides = [1, 1]} : vector<32x5xf32> to vector<32x1xf32>
    %cst_10 = arith.constant dense<0.000000e+00> : vector<32x8xf32>
    %13 = tpu.matmul %8, %6, %cst_10 {dimension_numbers = #tpu.dot_dimension_numbers<[1], [0], [0], [1], [0, 0, 1, 1], [], []>} : vector<32x32xf32>, vector<32x8xf32>, vector<32x8xf32> -> vector<32x8xf32>
    %14 = vector.broadcast %11 : vector<32x1xf32> to vector<32x8xf32>
    %15 = arith.addf %13, %14 : vector<32x8xf32>
    %cst_11 = arith.constant 0.000000e+00 : f32
    %16 = vector.broadcast %cst_11 : f32 to vector<32x8xf32>
    %17 = arith.cmpf ogt, %15, %16 : vector<32x8xf32>
    %cst_12 = arith.constant 0.000000e+00 : f32
    %18 = vector.broadcast %cst_12 : f32 to vector<32x8xf32>
    %19 = arith.minimumf %15, %18 : vector<32x8xf32>
    %20 = math.exp %19 : vector<32x8xf32>
    %cst_13 = arith.constant 1.000000e+00 : f32
    %21 = vector.broadcast %cst_13 : f32 to vector<32x8xf32>
    %22 = arith.subf %20, %21 : vector<32x8xf32>
    %23 = arith.select %17, %15, %22 : vector<32x8xi1>, vector<32x8xf32>
    %cst_14 = arith.constant dense<0.000000e+00> : vector<32x8xf32>
    %24 = tpu.matmul %10, %23, %cst_14 {dimension_numbers = #tpu.dot_dimension_numbers<[1], [0], [0], [1], [0, 0, 1, 1], [], []>} : vector<32x32xf32>, vector<32x8xf32>, vector<32x8xf32> -> vector<32x8xf32>
    %25 = vector.broadcast %12 : vector<32x1xf32> to vector<32x8xf32>
    %26 = arith.addf %24, %25 : vector<32x8xf32>
    %27 = arith.addf %6, %26 : vector<32x8xf32>
    %c2 = arith.constant 2 : index
    %c0_15 = arith.constant 0 : index
    %c0_16 = arith.constant 0 : index
    %28 = vector.load %arg4[%c2, %c0_15, %c0_16] : memref<4x32x32xf32, #tpu.memory_space<vmem>>, vector<1x32x32xf32>
    %29 = vector.shape_cast %28 : vector<1x32x32xf32> to vector<32x32xf32>
    %c3 = arith.constant 3 : index
    %c0_17 = arith.constant 0 : index
    %c0_18 = arith.constant 0 : index
    %30 = vector.load %arg4[%c3, %c0_17, %c0_18] : memref<4x32x32xf32, #tpu.memory_space<vmem>>, vector<1x32x32xf32>
    %31 = vector.shape_cast %30 : vector<1x32x32xf32> to vector<32x32xf32>
    %32 = vector.extract_strided_slice %1 {offsets = [0, 3], sizes = [32, 1], strides = [1, 1]} : vector<32x5xf32> to vector<32x1xf32>
    %33 = vector.extract_strided_slice %1 {offsets = [0, 4], sizes = [32, 1], strides = [1, 1]} : vector<32x5xf32> to vector<32x1xf32>
    %cst_19 = arith.constant dense<0.000000e+00> : vector<32x8xf32>
    %34 = tpu.matmul %29, %27, %cst_19 {dimension_numbers = #tpu.dot_dimension_numbers<[1], [0], [0], [1], [0, 0, 1, 1], [], []>} : vector<32x32xf32>, vector<32x8xf32>, vector<32x8xf32> -> vector<32x8xf32>
    %35 = vector.broadcast %32 : vector<32x1xf32> to vector<32x8xf32>
    %36 = arith.addf %34, %35 : vector<32x8xf32>
    %cst_20 = arith.constant 0.000000e+00 : f32
    %37 = vector.broadcast %cst_20 : f32 to vector<32x8xf32>
    %38 = arith.cmpf ogt, %36, %37 : vector<32x8xf32>
    %cst_21 = arith.constant 0.000000e+00 : f32
    %39 = vector.broadcast %cst_21 : f32 to vector<32x8xf32>
    %40 = arith.minimumf %36, %39 : vector<32x8xf32>
    %41 = math.exp %40 : vector<32x8xf32>
    %cst_22 = arith.constant 1.000000e+00 : f32
    %42 = vector.broadcast %cst_22 : f32 to vector<32x8xf32>
    %43 = arith.subf %41, %42 : vector<32x8xf32>
    %44 = arith.select %38, %36, %43 : vector<32x8xi1>, vector<32x8xf32>
    %cst_23 = arith.constant dense<0.000000e+00> : vector<32x8xf32>
    %45 = tpu.matmul %31, %44, %cst_23 {dimension_numbers = #tpu.dot_dimension_numbers<[1], [0], [0], [1], [0, 0, 1, 1], [], []>} : vector<32x32xf32>, vector<32x8xf32>, vector<32x8xf32> -> vector<32x8xf32>
    %46 = vector.broadcast %33 : vector<32x1xf32> to vector<32x8xf32>
    %47 = arith.addf %45, %46 : vector<32x8xf32>
    %48 = arith.addf %27, %47 : vector<32x8xf32>
    %c0_24 = arith.constant 0 : index
    %c0_25 = arith.constant 0 : index
    %49 = vector.load %arg5[%c0_24, %c0_25] : memref<4x32xf32, #tpu.memory_space<vmem>>, vector<4x32xf32>
    %cst_26 = arith.constant dense<0.000000e+00> : vector<4x8xf32>
    %50 = tpu.matmul %49, %48, %cst_26 {dimension_numbers = #tpu.dot_dimension_numbers<[1], [0], [0], [1], [0, 0, 1, 1], [], []>} : vector<4x32xf32>, vector<32x8xf32>, vector<4x8xf32> -> vector<4x8xf32>
    %c0_27 = arith.constant 0 : index
    %c0_28 = arith.constant 0 : index
    %51 = vector.load %arg6[%c0_27, %c0_28] : memref<4x1xf32, #tpu.memory_space<vmem>>, vector<4x1xf32>
    %52 = vector.broadcast %51 : vector<4x1xf32> to vector<4x8xf32>
    %53 = arith.addf %50, %52 : vector<4x8xf32>
    %c0_29 = arith.constant 0 : index
    %c0_30 = arith.constant 0 : index
    %54 = vector.load %arg7[%c0_29, %c0_30] : memref<4x8xf32, #tpu.memory_space<vmem>>, vector<4x8xf32>
    tpu.vector_store %arg7[%c0_29, %c0_30], %53 {strides = array<i32>} : memref<4x8xf32, #tpu.memory_space<vmem>>, vector<4x8xf32>,
    return
  }
  func.func @transform_0(%arg0: i32) -> (i32, i32) {
    %c0_i32 = arith.constant 0 : i32
    %c0_i32_0 = arith.constant 0 : i32
    return %c0_i32, %arg0 : i32, i32
  }
  func.func @transform_1(%arg0: i32) -> (i32, i32) {
    %c0_i32 = arith.constant 0 : i32
    %c0_i32_0 = arith.constant 0 : i32
    %c0_i32_1 = arith.constant 0 : i32
    return %c0_i32, %c0_i32_0 : i32, i32
  }
  func.func @transform_2(%arg0: i32) -> (i32, i32) {
    %c0_i32 = arith.constant 0 : i32
    %c0_i32_0 = arith.constant 0 : i32
    %c0_i32_1 = arith.constant 0 : i32
    return %c0_i32, %c0_i32_0 : i32, i32
  }
  func.func @transform_3(%arg0: i32) -> (i32, i32, i32) {
    %c0_i32 = arith.constant 0 : i32
    %c0_i32_0 = arith.constant 0 : i32
    %c0_i32_1 = arith.constant 0 : i32
    %c0_i32_2 = arith.constant 0 : i32
    return %c0_i32, %c0_i32_0, %c0_i32_1 : i32, i32, i32
  }
  func.func @transform_4(%arg0: i32) -> (i32, i32) {
    %c0_i32 = arith.constant 0 : i32
    %c0_i32_0 = arith.constant 0 : i32
    %c0_i32_1 = arith.constant 0 : i32
    return %c0_i32, %c0_i32_0 : i32, i32
  }
  func.func @transform_5(%arg0: i32) -> (i32, i32) {
    %c0_i32 = arith.constant 0 : i32
    %c0_i32_0 = arith.constant 0 : i32
    %c0_i32_1 = arith.constant 0 : i32
    return %c0_i32, %c0_i32_0 : i32, i32
  }
  func.func @transform_6(%arg0: i32) -> (i32, i32) {
    %c0_i32 = arith.constant 0 : i32
    %c0_i32_0 = arith.constant 0 : i32
    return %c0_i32, %arg0 : i32, i32
  }
}

</mosaic_0001>

<llo_original>
// kernel: _forward_jit.1
$region0: #{_forward_jit.1}
  #allocation0 [shape = 'u32[]', space=smem, size = 0x4, offset = 0x4, fixed_abs, tag = 'smem constant byte address 0x4 - core index']
  #allocation1 [shape = 'u32[144,128]{1,0:T(1,128)}', space=vmem, size = 0x12000, scoped, tag = 'internal scratch']
  %s0 = inlined_call_operand.vmem [shape: f32[4,8], index: 0, kind: input, shape index: {}]
  %s1 = inlined_call_operand.vmem [shape: f32[32,4], index: 1, kind: input, shape index: {}]
  %s2 = inlined_call_operand.vmem [shape: f32[32,5], index: 2, kind: input, shape index: {}]
  %s3 = inlined_call_operand.hbm [shape: f32[4,32,32], index: 3, kind: input, shape index: {}]
  %s4 = inlined_call_operand.vmem [shape: f32[4,32], index: 4, kind: input, shape index: {}]
  %s5 = inlined_call_operand.vmem [shape: f32[4,1], index: 5, kind: input, shape index: {}]
  %s6 = inlined_call_operand.hbm [shape: f32[4,8], index: 6, kind: output, shape index: {}]
  %s7 = sld [smem:[#allocation0]]
  $region38: #{_forward_jit.1} parent=0
    _
  %s9 = ssub.s32 1, %s7
  %s10 = scalar_select 0, %s9, %s7
  $region1: #{_forward_jit.1} parent=0
    #allocation2 [shape = 'u8[65536]{0}', space=vmem, size = 0x10000, scoped, tag = 'input window, operand 3, single buffered']
    #allocation3 [shape = 's32[1]{0}', space=sflag, size = 0x4, scoped, tag = 'scoped memory for _forward_jit.1']
    #allocation4 [shape = 's32[1]{0}', space=sflag, size = 0x4, scoped, tag = 'scoped memory for _forward_jit.1']
    #allocation5 [shape = 'u8[2048]{0}', space=vmem, size = 0x800, scoped, tag = 'output window, operand 0, single buffered']
    %11 = vsyncpa [#allocation3], 0
    %12 = vsyncpa [#allocation4], 0
    // Predicated region
    $region2: #{_forward_jit.1} parent=1 // pred_check
      _
    $region3: #{_forward_jit.1} parent=1 // pred_check_branch
      %14 = sbr.rel (0) target = $region5
    $region4: #{_forward_jit.1} parent=1 // pred_region
      _
    $region5: #{_forward_jit.1} parent=1 // pred_fallthru
      _
    // Predicated region
    $region6: #{_forward_jit.1} parent=1 // pred_check
      _
    $region7: #{_forward_jit.1} parent=1 // pred_check_branch
      %16 = sbr.rel (0) target = $region9
    $region8: #{_forward_jit.1} parent=1 // pred_region
      _
    $region9: #{_forward_jit.1} parent=1 // pred_fallthru
      _
    // Predicated region
    $region10: #{_forward_jit.1} parent=1 // pred_check
      _
    $region11: #{_forward_jit.1} parent=1 // pred_check_branch
      %18 = sbr.rel (0) target = $region13
    $region12: #{_forward_jit.1} parent=1 // pred_region
      _
    $region13: #{_forward_jit.1} parent=1 // pred_fallthru
      _
    // Predicated region
    $region14: #{_forward_jit.1} parent=1 // pred_check
      _
    $region15: #{_forward_jit.1} parent=1 // pred_check_branch
      %20 = sbr.rel (0) target = $region17
    $region16: #{_forward_jit.1} parent=1 // pred_region
      %s22 = ssub.s32 2048, 2048
      %23 = vsyncadd [#allocation3], %s22
      %s24 = sshll.u32 [#allocation2], 4
      %s25 = int_to_ptr.vmem [resolvable:$true] %s24
      %30 = dma.hbm_to_vmem [thread:$0]  %s3, 2048, %s25, [#allocation3], 128, 128, 8
    $region17: #{_forward_jit.1} parent=1 // pred_fallthru
      _
    // Predicated region
    $region18: #{_forward_jit.1} parent=1 // pred_check
      _
    $region19: #{_forward_jit.1} parent=1 // pred_check_branch
      %32 = sbr.rel (0) target = $region21
    $region20: #{_forward_jit.1} parent=1 // pred_region
      _
    $region21: #{_forward_jit.1} parent=1 // pred_fallthru
      _
    // Predicated region
    $region22: #{_forward_jit.1} parent=1 // pred_check
      _
    $region23: #{_forward_jit.1} parent=1 // pred_check_branch
      %34 = sbr.rel (0) target = $region25
    $region24: #{_forward_jit.1} parent=1 // pred_region
      _
    $region25: #{_forward_jit.1} parent=1 // pred_fallthru
      _
    // Predicated region
    $region26: #{_forward_jit.1} parent=1 // pred_check
      _
    $region27: #{_forward_jit.1} parent=1 // pred_check_branch
      %36 = sbr.rel (0) target = $region29
    $region28: #{_forward_jit.1} parent=1 // pred_region
      %37 = dma.done [#allocation3], 2048
    $region29: #{_forward_jit.1} parent=1 // pred_fallthru
      _
    %v38 = vld [vmem:[%s0] sm:$0xf]
    %v39 = vld [vmem:[%s2] sm:$0xff]
    %v40 = vld [vmem:[%s2 + $0x8] sm:$0xff]
    %v41 = vld [vmem:[%s2 + $0x10] sm:$0xff]
    %v42 = vld [vmem:[%s2 + $0x18] sm:$0xff]
    %v43 = vld [vmem:[%s1] sm:$0xff]
    %v44 = vld [vmem:[%s1 + $0x8] sm:$0xff]
    %v45 = vld [vmem:[%s1 + $0x10] sm:$0xff]
    %v46 = vld [vmem:[%s1 + $0x18] sm:$0xff]
    %48 = vset.pattern.permute.xlu0 0
    %49 = vperm.xlu0 %48, %v39
    %v50 = vpop.permute.xlu0 %49
    %53 = vset.pattern.permute.xlu0 0
    %54 = vperm.xlu0 %53, %v40
    %v55 = vpop.permute.xlu0 %54
    %58 = vset.pattern.permute.xlu0 0
    %59 = vperm.xlu0 %58, %v41
    %v60 = vpop.permute.xlu0 %59
    %63 = vset.pattern.permute.xlu0 0
    %64 = vperm.xlu0 %63, %v42
    %v65 = vpop.permute.xlu0 %64
    %vm67 = vcmask 31744
    %v69 = vsel %vm67, %v43, 0
    %v72 = vsel %vm67, %v44, 0
    %v75 = vsel %vm67, %v45, 0
    %v78 = vsel %vm67, %v46, 0
    %vm80 = vcmask 1043456
    %v82 = vsel %vm80, %v38, 0
    %84 = vmatprep.subr.mxu0 0.0
    %85 = vmatpush1.msra.mxu0 %v82
    %86 = vmatprep.subr.mxu0 0.0
    %87 = vmatpush1.msra.mxu0 0.0
    %88 = vmatprep.subr.mxu0 0.0
    %89 = vmatpush1.msra.mxu0 0.0
    %90 = vmatprep.subr.mxu0 0.0
    %91 = vmatpush1.msra.mxu0 0.0
    %92 = vmatprep.subr.mxu0 0.0
    %93 = vmatpush1.msra.mxu0 0.0
    %94 = vmatprep.subr.mxu0 0.0
    %95 = vmatpush1.msra.mxu0 0.0
    %96 = vmatprep.subr.mxu0 0.0
    %97 = vmatpush1.msra.mxu0 0.0
    %98 = vmatprep.subr.mxu0 0.0
    %99 = vmatpush1.msra.mxu0 0.0
    %100 = vmatprep.subr.mxu0 0.0
    %101 = vmatpush1.msra.mxu0 0.0
    %102 = vmatprep.subr.mxu0 0.0
    %103 = vmatpush1.msra.mxu0 0.0
    %104 = vmatprep.subr.mxu0 0.0
    %105 = vmatpush1.msra.mxu0 0.0
    %106 = vmatprep.subr.mxu0 0.0
    %107 = vmatpush1.msra.mxu0 0.0
    %108 = vmatprep.subr.mxu0 0.0
    %109 = vmatpush1.msra.mxu0 0.0
    %110 = vmatprep.subr.mxu0 0.0
    %111 = vmatpush1.msra.mxu0 0.0
    %112 = vmatprep.subr.mxu0 0.0
    %113 = vmatpush1.msra.mxu0 0.0
    %114 = vmatprep.subr.mxu0 0.0
    %115 = vmatpush1.msra.mxu0 0.0
    %116 = vmatprep.subr.mxu0 0.0
    %117 = vmatpush1.msra.mxu0 0.0
    %118 = vmatprep.subr.mxu0 0.0
    %119 = vmatpush1.msra.mxu0 0.0
    %120 = vmatprep.subr.mxu0 0.0
    %121 = vmatpush1.msra.mxu0 0.0
    %122 = vmatprep.subr.mxu0 0.0
    %123 = vmatpush1.msra.mxu0 0.0
    %124 = vmatprep.subr.mxu0 0.0
    %125 = vmatpush1.msra.mxu0 0.0
    %126 = vmatprep.subr.mxu0 0.0
    %127 = vmatpush1.msra.mxu0 0.0
    %128 = vmatprep.subr.mxu0 0.0
    %129 = vmatpush1.msra.mxu0 0.0
    %130 = vmatprep.subr.mxu0 0.0
    %131 = vmatpush1.msra.mxu0 0.0
    %132 = vmatprep.subr.mxu0 0.0
    %133 = vmatpush1.msra.mxu0 0.0
    %134 = vmatprep.subr.mxu0 0.0
    %135 = vmatpush1.msra.mxu0 0.0
    %136 = vmatprep.subr.mxu0 0.0
    %137 = vmatpush1.msra.mxu0 0.0
    %138 = vmatprep.subr.mxu0 0.0
    %139 = vmatpush1.msra.mxu0 0.0
    %140 = vmatprep.subr.mxu0 0.0
    %141 = vmatpush1.msra.mxu0 0.0
    %142 = vmatprep.subr.mxu0 0.0
    %143 = vmatpush1.msra.mxu0 0.0
    %144 = vmatprep.subr.mxu0 0.0
    %145 = vmatpush1.msra.mxu0 0.0
    %146 = vmatprep.subr.mxu0 0.0
    %147 = vmatpush1.msra.mxu0 0.0
    %148 = vmatprep.mubr.f32.mxu0 0.0
    %149 = vmatmul.mubr.f32.gmra.mrb[0].mxu0 %v69
    %v150 = vpop.f32.mrb[0].mxu0
    %v151 = vadd.f32 %v50, %v150
    %v152 = vpop.f32.mrb[0].mxu0
    %153 = vmatprep.mubr.f32.mxu0 0.0
    %154 = vmatmul.mubr.f32.gmra.mrb[0].mxu0 %v72
    %v155 = vpop.f32.mrb[0].mxu0
    %v156 = vadd.f32 %v55, %v155
    %v157 = vpop.f32.mrb[0].mxu0
    %158 = vmatprep.mubr.f32.mxu0 0.0
    %159 = vmatmul.mubr.f32.gmra.mrb[0].mxu0 %v75
    %v160 = vpop.f32.mrb[0].mxu0
    %v161 = vadd.f32 %v60, %v160
    %v162 = vpop.f32.mrb[0].mxu0
    %163 = vmatprep.mubr.f32.mxu0 0.0
    %164 = vmatmul.mubr.f32.gmra.mrb[0].mxu0 %v78
    %v165 = vpop.f32.mrb[0].mxu0
    %v166 = vadd.f32 %v65, %v165
    %v167 = vpop.f32.mrb[0].mxu0
    %168 = vdwg.mxu0
    %v169 = vld [vmem:[#allocation2] sm:$0xff]
    %v170 = vld [vmem:[#allocation2 + $0x8] sm:$0xff]
    %v171 = vld [vmem:[#allocation2 + $0x10] sm:$0xff]
    %v172 = vld [vmem:[#allocation2 + $0x18] sm:$0xff]
    %s173 = scalar_lea.vmem [#allocation2], 32
    %v174 = vld [vmem:[%s173] sm:$0xff]
    %v175 = vld [vmem:[%s173 + $0x8] sm:$0xff]
    %v176 = vld [vmem:[%s173 + $0x10] sm:$0xff]
    %v177 = vld [vmem:[%s173 + $0x18] sm:$0xff]
    %178 = vset.pattern.permute.xlu0 1
    %179 = vperm.xlu0 %178, %v39
    %v180 = vpop.permute.xlu0 %179
    %182 = vset.pattern.permute.xlu0 1
    %183 = vperm.xlu0 %182, %v40
    %v184 = vpop.permute.xlu0 %183
    %186 = vset.pattern.permute.xlu0 1
    %187 = vperm.xlu0 %186, %v41
    %v188 = vpop.permute.xlu0 %187
    %190 = vset.pattern.permute.xlu0 1
    %191 = vperm.xlu0 %190, %v42
    %v192 = vpop.permute.xlu0 %191
    %vm194 = vcmask 261120
    %v196 = vsel %vm194, %v169, 0
    %v199 = vsel %vm194, %v170, 0
    %v202 = vsel %vm194, %v171, 0
    %v205 = vsel %vm194, %v172, 0
    %207 = vmatprep.subr.mxu0 0.0
    %208 = vmatpush1.msra.mxu0 %v151
    %209 = vmatprep.subr.mxu0 0.0
    %210 = vmatpush1.msra.mxu0 %v156
    %211 = vmatprep.subr.mxu0 0.0
    %212 = vmatpush1.msra.mxu0 %v161
    %213 = vmatprep.subr.mxu0 0.0
    %214 = vmatpush1.msra.mxu0 %v166
    %215 = vmatprep.subr.mxu0 0.0
    %216 = vmatpush1.msra.mxu0 0.0
    %217 = vmatprep.subr.mxu0 0.0
    %218 = vmatpush1.msra.mxu0 0.0
    %219 = vmatprep.subr.mxu0 0.0
    %220 = vmatpush1.msra.mxu0 0.0
    %221 = vmatprep.subr.mxu0 0.0
    %222 = vmatpush1.msra.mxu0 0.0
    %223 = vmatprep.subr.mxu0 0.0
    %224 = vmatpush1.msra.mxu0 0.0
    %225 = vmatprep.subr.mxu0 0.0
    %226 = vmatpush1.msra.mxu0 0.0
    %227 = vmatprep.subr.mxu0 0.0
    %228 = vmatpush1.msra.mxu0 0.0
    %229 = vmatprep.subr.mxu0 0.0
    %230 = vmatpush1.msra.mxu0 0.0
    %231 = vmatprep.subr.mxu0 0.0
    %232 = vmatpush1.msra.mxu0 0.0
    %233 = vmatprep.subr.mxu0 0.0
    %234 = vmatpush1.msra.mxu0 0.0
    %235 = vmatprep.subr.mxu0 0.0
    %236 = vmatpush1.msra.mxu0 0.0
    %237 = vmatprep.subr.mxu0 0.0
    %238 = vmatpush1.msra.mxu0 0.0
    %239 = vmatprep.subr.mxu0 0.0
    %240 = vmatpush1.msra.mxu0 0.0
    %241 = vmatprep.subr.mxu0 0.0
    %242 = vmatpush1.msra.mxu0 0.0
    %243 = vmatprep.subr.mxu0 0.0
    %244 = vmatpush1.msra.mxu0 0.0
    %245 = vmatprep.subr.mxu0 0.0
    %246 = vmatpush1.msra.mxu0 0.0
    %247 = vmatprep.subr.mxu0 0.0
    %248 = vmatpush1.msra.mxu0 0.0
    %249 = vmatprep.subr.mxu0 0.0
    %250 = vmatpush1.msra.mxu0 0.0
    %251 = vmatprep.subr.mxu0 0.0
    %252 = vmatpush1.msra.mxu0 0.0
    %253 = vmatprep.subr.mxu0 0.0
    %254 = vmatpush1.msra.mxu0 0.0
    %255 = vmatprep.subr.mxu0 0.0
    %256 = vmatpush1.msra.mxu0 0.0
    %257 = vmatprep.subr.mxu0 0.0
    %258 = vmatpush1.msra.mxu0 0.0
    %259 = vmatprep.subr.mxu0 0.0
    %260 = vmatpush1.msra.mxu0 0.0
    %261 = vmatprep.subr.mxu0 0.0
    %262 = vmatpush1.msra.mxu0 0.0
    %263 = vmatprep.subr.mxu0 0.0
    %264 = vmatpush1.msra.mxu0 0.0
    %265 = vmatprep.subr.mxu0 0.0
    %266 = vmatpush1.msra.mxu0 0.0
    %267 = vmatprep.subr.mxu0 0.0
    %268 = vmatpush1.msra.mxu0 0.0
    %269 = vmatprep.subr.mxu0 0.0
    %270 = vmatpush1.msra.mxu0 0.0
    %271 = vmatprep.mubr.f32.mxu0 0.0
    %272 = vmatmul.mubr.f32.gmra.mrb[0].mxu0 %v196
    %v273 = vpop.f32.mrb[0].mxu0
    %v274 = vadd.f32 %v180, %v273
    %v275 = vpop.f32.mrb[0].mxu0
    %276 = vmatprep.mubr.f32.mxu0 0.0
    %277 = vmatmul.mubr.f32.gmra.mrb[0].mxu0 %v199
    %v278 = vpop.f32.mrb[0].mxu0
    %v279 = vadd.f32 %v184, %v278
    %v280 = vpop.f32.mrb[0].mxu0
    %281 = vmatprep.mubr.f32.mxu0 0.0
    %282 = vmatmul.mubr.f32.gmra.mrb[0].mxu0 %v202
    %v283 = vpop.f32.mrb[0].mxu0
    %v284 = vadd.f32 %v188, %v283
    %v285 = vpop.f32.mrb[0].mxu0
    %286 = vmatprep.mubr.f32.mxu0 0.0
    %287 = vmatmul.mubr.f32.gmra.mrb[0].mxu0 %v205
    %v288 = vpop.f32.mrb[0].mxu0
    %v289 = vadd.f32 %v192, %v288
    %v290 = vpop.f32.mrb[0].mxu0
    %291 = vdwg.mxu0
    %vm292 = vcmp.gt.f32.partialorder %v274, 0.0
    %vm293 = vcmp.gt.f32.partialorder %v279, 0.0
    %vm294 = vcmp.gt.f32.partialorder %v284, 0.0
    %vm295 = vcmp.gt.f32.partialorder %v289, 0.0
    %v296 = vmin.f32 %v274, 0.0
    %v297 = vmin.f32 %v279, 0.0
    %v298 = vmin.f32 %v284, 0.0
    %v299 = vmin.f32 %v289, 0.0
    %v300 = vmul.f32 %v296, 1.442695
    %v301 = vpow.pop %v300
    %v302 = vmul.f32 %v297, 1.442695
    %v303 = vpow.pop %v302
    %v304 = vmul.f32 %v298, 1.442695
    %v305 = vpow.pop %v304
    %v306 = vmul.f32 %v299, 1.442695
    %v307 = vpow.pop %v306
    %v308 = vsub.f32 %v301, 1.0
    %v309 = vsub.f32 %v303, 1.0
    %v310 = vsub.f32 %v305, 1.0
    %v311 = vsub.f32 %v307, 1.0
    %v312 = vsel %vm292, %v274, %v308
    %v313 = vsel %vm293, %v279, %v309
    %v314 = vsel %vm294, %v284, %v310
    %v315 = vsel %vm295, %v289, %v311
    %316 = vset.pattern.permute.xlu0 2
    %317 = vperm.xlu0 %316, %v39
    %v318 = vpop.permute.xlu0 %317
    %320 = vset.pattern.permute.xlu0 2
    %321 = vperm.xlu0 %320, %v40
    %v322 = vpop.permute.xlu0 %321
    %324 = vset.pattern.permute.xlu0 2
    %325 = vperm.xlu0 %324, %v41
    %v326 = vpop.permute.xlu0 %325
    %328 = vset.pattern.permute.xlu0 2
    %329 = vperm.xlu0 %328, %v42
    %v330 = vpop.permute.xlu0 %329
    %v333 = vsel %vm194, %v174, 0
    %v336 = vsel %vm194, %v175, 0
    %v339 = vsel %vm194, %v176, 0
    %v342 = vsel %vm194, %v177, 0
    %344 = vmatprep.subr.mxu0 0.0
    %345 = vmatpush1.msra.mxu0 %v312
    %346 = vmatprep.subr.mxu0 0.0
    %347 = vmatpush1.msra.mxu0 %v313
    %348 = vmatprep.subr.mxu0 0.0
    %349 = vmatpush1.msra.mxu0 %v314
    %350 = vmatprep.subr.mxu0 0.0
    %351 = vmatpush1.msra.mxu0 %v315
    %352 = vmatprep.subr.mxu0 0.0
    %353 = vmatpush1.msra.mxu0 0.0
    %354 = vmatprep.subr.mxu0 0.0
    %355 = vmatpush1.msra.mxu0 0.0
    %356 = vmatprep.subr.mxu0 0.0
    %357 = vmatpush1.msra.mxu0 0.0
    %358 = vmatprep.subr.mxu0 0.0
    %359 = vmatpush1.msra.mxu0 0.0
    %360 = vmatprep.subr.mxu0 0.0
    %361 = vmatpush1.msra.mxu0 0.0
    %362 = vmatprep.subr.mxu0 0.0
    %363 = vmatpush1.msra.mxu0 0.0
    %364 = vmatprep.subr.mxu0 0.0
    %365 = vmatpush1.msra.mxu0 0.0
    %366 = vmatprep.subr.mxu0 0.0
    %367 = vmatpush1.msra.mxu0 0.0
    %368 = vmatprep.subr.mxu0 0.0
    %369 = vmatpush1.msra.mxu0 0.0
    %370 = vmatprep.subr.mxu0 0.0
    %371 = vmatpush1.msra.mxu0 0.0
    %372 = vmatprep.subr.mxu0 0.0
    %373 = vmatpush1.msra.mxu0 0.0
    %374 = vmatprep.subr.mxu0 0.0
    %375 = vmatpush1.msra.mxu0 0.0
    %376 = vmatprep.subr.mxu0 0.0
    %377 = vmatpush1.msra.mxu0 0.0
    %378 = vmatprep.subr.mxu0 0.0
    %379 = vmatpush1.msra.mxu0 0.0
    %380 = vmatprep.subr.mxu0 0.0
    %381 = vmatpush1.msra.mxu0 0.0
    %382 = vmatprep.subr.mxu0 0.0
    %383 = vmatpush1.msra.mxu0 0.0
    %384 = vmatprep.subr.mxu0 0.0
    %385 = vmatpush1.msra.mxu0 0.0
    %386 = vmatprep.subr.mxu0 0.0
    %387 = vmatpush1.msra.mxu0 0.0
    %388 = vmatprep.subr.mxu0 0.0
    %389 = vmatpush1.msra.mxu0 0.0
    %390 = vmatprep.subr.mxu0 0.0
    %391 = vmatpush1.msra.mxu0 0.0
    %392 = vmatprep.subr.mxu0 0.0
    %393 = vmatpush1.msra.mxu0 0.0
    %394 = vmatprep.subr.mxu0 0.0
    %395 = vmatpush1.msra.mxu0 0.0
    %396 = vmatprep.subr.mxu0 0.0
    %397 = vmatpush1.msra.mxu0 0.0
    %398 = vmatprep.subr.mxu0 0.0
    %399 = vmatpush1.msra.mxu0 0.0
    %400 = vmatprep.subr.mxu0 0.0
    %401 = vmatpush1.msra.mxu0 0.0
    %402 = vmatprep.subr.mxu0 0.0
    %403 = vmatpush1.msra.mxu0 0.0
    %404 = vmatprep.subr.mxu0 0.0
    %405 = vmatpush1.msra.mxu0 0.0
    %406 = vmatprep.subr.mxu0 0.0
    %407 = vmatpush1.msra.mxu0 0.0
    %408 = vmatprep.mubr.f32.mxu0 0.0
    %409 = vmatmul.mubr.f32.gmra.mrb[0].mxu0 %v333
    %v410 = vpop.f32.mrb[0].mxu0
    %v411 = vadd.f32 %v318, %v410
    %v412 = vpop.f32.mrb[0].mxu0
    %413 = vmatprep.mubr.f32.mxu0 0.0
    %414 = vmatmul.mubr.f32.gmra.mrb[0].mxu0 %v336
    %v415 = vpop.f32.mrb[0].mxu0
    %v416 = vadd.f32 %v322, %v415
    %v417 = vpop.f32.mrb[0].mxu0
    %418 = vmatprep.mubr.f32.mxu0 0.0
    %419 = vmatmul.mubr.f32.gmra.mrb[0].mxu0 %v339
    %v420 = vpop.f32.mrb[0].mxu0
    %v421 = vadd.f32 %v326, %v420
    %v422 = vpop.f32.mrb[0].mxu0
    %423 = vmatprep.mubr.f32.mxu0 0.0
    %424 = vmatmul.mubr.f32.gmra.mrb[0].mxu0 %v342
    %v425 = vpop.f32.mrb[0].mxu0
    %v426 = vadd.f32 %v330, %v425
    %v427 = vpop.f32.mrb[0].mxu0
    %428 = vdwg.mxu0
    %v429 = vadd.f32 %v151, %v411
    %v430 = vadd.f32 %v156, %v416
    %v431 = vadd.f32 %v161, %v421
    %v432 = vadd.f32 %v166, %v426
    %s433 = scalar_lea.vmem [#allocation2], 64
    %v434 = vld [vmem:[%s433] sm:$0xff]
    %v435 = vld [vmem:[%s433 + $0x8] sm:$0xff]
    %v436 = vld [vmem:[%s433 + $0x10] sm:$0xff]
    %v437 = vld [vmem:[%s433 + $0x18] sm:$0xff]
    %s438 = scalar_lea.vmem [#allocation2], 96
    %v439 = vld [vmem:[%s438] sm:$0xff]
    %v440 = vld [vmem:[%s438 + $0x8] sm:$0xff]
    %v441 = vld [vmem:[%s438 + $0x10] sm:$0xff]
    %v442 = vld [vmem:[%s438 + $0x18] sm:$0xff]
    %443 = vset.pattern.permute.xlu0 3
    %444 = vperm.xlu0 %443, %v39
    %v445 = vpop.permute.xlu0 %444
    %447 = vset.pattern.permute.xlu0 3
    %448 = vperm.xlu0 %447, %v40
    %v449 = vpop.permute.xlu0 %448
    %451 = vset.pattern.permute.xlu0 3
    %452 = vperm.xlu0 %451, %v41
    %v453 = vpop.permute.xlu0 %452
    %455 = vset.pattern.permute.xlu0 3
    %456 = vperm.xlu0 %455, %v42
    %v457 = vpop.permute.xlu0 %456
    %v460 = vsel %vm194, %v434, 0
    %v463 = vsel %vm194, %v435, 0
    %v466 = vsel %vm194, %v436, 0
    %v469 = vsel %vm194, %v437, 0
    %471 = vmatprep.subr.mxu0 0.0
    %472 = vmatpush1.msra.mxu0 %v429
    %473 = vmatprep.subr.mxu0 0.0
    %474 = vmatpush1.msra.mxu0 %v430
    %475 = vmatprep.subr.mxu0 0.0
    %476 = vmatpush1.msra.mxu0 %v431
    %477 = vmatprep.subr.mxu0 0.0
    %478 = vmatpush1.msra.mxu0 %v432
    %479 = vmatprep.subr.mxu0 0.0
    %480 = vmatpush1.msra.mxu0 0.0
    %481 = vmatprep.subr.mxu0 0.0
    %482 = vmatpush1.msra.mxu0 0.0
    %483 = vmatprep.subr.mxu0 0.0
    %484 = vmatpush1.msra.mxu0 0.0
    %485 = vmatprep.subr.mxu0 0.0
    %486 = vmatpush1.msra.mxu0 0.0
    %487 = vmatprep.subr.mxu0 0.0
    %488 = vmatpush1.msra.mxu0 0.0
    %489 = vmatprep.subr.mxu0 0.0
    %490 = vmatpush1.msra.mxu0 0.0
    %491 = vmatprep.subr.mxu0 0.0
    %492 = vmatpush1.msra.mxu0 0.0
    %493 = vmatprep.subr.mxu0 0.0
    %494 = vmatpush1.msra.mxu0 0.0
    %495 = vmatprep.subr.mxu0 0.0
    %496 = vmatpush1.msra.mxu0 0.0
    %497 = vmatprep.subr.mxu0 0.0
    %498 = vmatpush1.msra.mxu0 0.0
    %499 = vmatprep.subr.mxu0 0.0
    %500 = vmatpush1.msra.mxu0 0.0
    %501 = vmatprep.subr.mxu0 0.0
    %502 = vmatpush1.msra.mxu0 0.0
    %503 = vmatprep.subr.mxu0 0.0
    %504 = vmatpush1.msra.mxu0 0.0
    %505 = vmatprep.subr.mxu0 0.0
    %506 = vmatpush1.msra.mxu0 0.0
    %507 = vmatprep.subr.mxu0 0.0
    %508 = vmatpush1.msra.mxu0 0.0
    %509 = vmatprep.subr.mxu0 0.0
    %510 = vmatpush1.msra.mxu0 0.0
    %511 = vmatprep.subr.mxu0 0.0
    %512 = vmatpush1.msra.mxu0 0.0
    %513 = vmatprep.subr.mxu0 0.0
    %514 = vmatpush1.msra.mxu0 0.0
    %515 = vmatprep.subr.mxu0 0.0
    %516 = vmatpush1.msra.mxu0 0.0
    %517 = vmatprep.subr.mxu0 0.0
    %518 = vmatpush1.msra.mxu0 0.0
    %519 = vmatprep.subr.mxu0 0.0
    %520 = vmatpush1.msra.mxu0 0.0
    %521 = vmatprep.subr.mxu0 0.0
    %522 = vmatpush1.msra.mxu0 0.0
    %523 = vmatprep.subr.mxu0 0.0
    %524 = vmatpush1.msra.mxu0 0.0
    %525 = vmatprep.subr.mxu0 0.0
    %526 = vmatpush1.msra.mxu0 0.0
    %527 = vmatprep.subr.mxu0 0.0
    %528 = vmatpush1.msra.mxu0 0.0
    %529 = vmatprep.subr.mxu0 0.0
    %530 = vmatpush1.msra.mxu0 0.0
    %531 = vmatprep.subr.mxu0 0.0
    %532 = vmatpush1.msra.mxu0 0.0
    %533 = vmatprep.subr.mxu0 0.0
    %534 = vmatpush1.msra.mxu0 0.0
    %535 = vmatprep.mubr.f32.mxu0 0.0
    %536 = vmatmul.mubr.f32.gmra.mrb[0].mxu0 %v460
    %v537 = vpop.f32.mrb[0].mxu0
    %v538 = vadd.f32 %v445, %v537
    %v539 = vpop.f32.mrb[0].mxu0
    %540 = vmatprep.mubr.f32.mxu0 0.0
    %541 = vmatmul.mubr.f32.gmra.mrb[0].mxu0 %v463
    %v542 = vpop.f32.mrb[0].mxu0
    %v543 = vadd.f32 %v449, %v542
    %v544 = vpop.f32.mrb[0].mxu0
    %545 = vmatprep.mubr.f32.mxu0 0.0
    %546 = vmatmul.mubr.f32.gmra.mrb[0].mxu0 %v466
    %v547 = vpop.f32.mrb[0].mxu0
    %v548 = vadd.f32 %v453, %v547
    %v549 = vpop.f32.mrb[0].mxu0
    %550 = vmatprep.mubr.f32.mxu0 0.0
    %551 = vmatmul.mubr.f32.gmra.mrb[0].mxu0 %v469
    %v552 = vpop.f32.mrb[0].mxu0
    %v553 = vadd.f32 %v457, %v552
    %v554 = vpop.f32.mrb[0].mxu0
    %555 = vdwg.mxu0
    %vm556 = vcmp.gt.f32.partialorder %v538, 0.0
    %vm557 = vcmp.gt.f32.partialorder %v543, 0.0
    %vm558 = vcmp.gt.f32.partialorder %v548, 0.0
    %vm559 = vcmp.gt.f32.partialorder %v553, 0.0
    %v560 = vmin.f32 %v538, 0.0
    %v561 = vmin.f32 %v543, 0.0
    %v562 = vmin.f32 %v548, 0.0
    %v563 = vmin.f32 %v553, 0.0
    %v564 = vmul.f32 %v560, 1.442695
    %v565 = vpow.pop %v564
    %v566 = vmul.f32 %v561, 1.442695
    %v567 = vpow.pop %v566
    %v568 = vmul.f32 %v562, 1.442695
    %v569 = vpow.pop %v568
    %v570 = vmul.f32 %v563, 1.442695
    %v571 = vpow.pop %v570
    %v572 = vsub.f32 %v565, 1.0
    %v573 = vsub.f32 %v567, 1.0
    %v574 = vsub.f32 %v569, 1.0
    %v575 = vsub.f32 %v571, 1.0
    %v576 = vsel %vm556, %v538, %v572
    %v577 = vsel %vm557, %v543, %v573
    %v578 = vsel %vm558, %v548, %v574
    %v579 = vsel %vm559, %v553, %v575
    %580 = vset.pattern.permute.xlu0 4
    %581 = vperm.xlu0 %580, %v39
    %v582 = vpop.permute.xlu0 %581
    %584 = vset.pattern.permute.xlu0 4
    %585 = vperm.xlu0 %584, %v40
    %v586 = vpop.permute.xlu0 %585
    %588 = vset.pattern.permute.xlu0 4
    %589 = vperm.xlu0 %588, %v41
    %v590 = vpop.permute.xlu0 %589
    %592 = vset.pattern.permute.xlu0 4
    %593 = vperm.xlu0 %592, %v42
    %v594 = vpop.permute.xlu0 %593
    %v597 = vsel %vm194, %v439, 0
    %v600 = vsel %vm194, %v440, 0
    %v603 = vsel %vm194, %v441, 0
    %v606 = vsel %vm194, %v442, 0
    %608 = vmatprep.subr.mxu0 0.0
    %609 = vmatpush1.msra.mxu0 %v576
    %610 = vmatprep.subr.mxu0 0.0
    %611 = vmatpush1.msra.mxu0 %v577
    %612 = vmatprep.subr.mxu0 0.0
    %613 = vmatpush1.msra.mxu0 %v578
    %614 = vmatprep.subr.mxu0 0.0
    %615 = vmatpush1.msra.mxu0 %v579
    %616 = vmatprep.subr.mxu0 0.0
    %617 = vmatpush1.msra.mxu0 0.0
    %618 = vmatprep.subr.mxu0 0.0
    %619 = vmatpush1.msra.mxu0 0.0
    %620 = vmatprep.subr.mxu0 0.0
    %621 = vmatpush1.msra.mxu0 0.0
    %622 = vmatprep.subr.mxu0 0.0
    %623 = vmatpush1.msra.mxu0 0.0
    %624 = vmatprep.subr.mxu0 0.0
    %625 = vmatpush1.msra.mxu0 0.0
    %626 = vmatprep.subr.mxu0 0.0
    %627 = vmatpush1.msra.mxu0 0.0
    %628 = vmatprep.subr.mxu0 0.0
    %629 = vmatpush1.msra.mxu0 0.0
    %630 = vmatprep.subr.mxu0 0.0
    %631 = vmatpush1.msra.mxu0 0.0
    %632 = vmatprep.subr.mxu0 0.0
    %633 = vmatpush1.msra.mxu0 0.0
    %634 = vmatprep.subr.mxu0 0.0
    %635 = vmatpush1.msra.mxu0 0.0
    %636 = vmatprep.subr.mxu0 0.0
    %637 = vmatpush1.msra.mxu0 0.0
    %638 = vmatprep.subr.mxu0 0.0
    %639 = vmatpush1.msra.mxu0 0.0
    %640 = vmatprep.subr.mxu0 0.0
    %641 = vmatpush1.msra.mxu0 0.0
    %642 = vmatprep.subr.mxu0 0.0
    %643 = vmatpush1.msra.mxu0 0.0
    %644 = vmatprep.subr.mxu0 0.0
    %645 = vmatpush1.msra.mxu0 0.0
    %646 = vmatprep.subr.mxu0 0.0
    %647 = vmatpush1.msra.mxu0 0.0
    %648 = vmatprep.subr.mxu0 0.0
    %649 = vmatpush1.msra.mxu0 0.0
    %650 = vmatprep.subr.mxu0 0.0
    %651 = vmatpush1.msra.mxu0 0.0
    %652 = vmatprep.subr.mxu0 0.0
    %653 = vmatpush1.msra.mxu0 0.0
    %654 = vmatprep.subr.mxu0 0.0
    %655 = vmatpush1.msra.mxu0 0.0
    %656 = vmatprep.subr.mxu0 0.0
    %657 = vmatpush1.msra.mxu0 0.0
    %658 = vmatprep.subr.mxu0 0.0
    %659 = vmatpush1.msra.mxu0 0.0
    %660 = vmatprep.subr.mxu0 0.0
    %661 = vmatpush1.msra.mxu0 0.0
    %662 = vmatprep.subr.mxu0 0.0
    %663 = vmatpush1.msra.mxu0 0.0
    %664 = vmatprep.subr.mxu0 0.0
    %665 = vmatpush1.msra.mxu0 0.0
    %666 = vmatprep.subr.mxu0 0.0
    %667 = vmatpush1.msra.mxu0 0.0
    %668 = vmatprep.subr.mxu0 0.0
    %669 = vmatpush1.msra.mxu0 0.0
    %670 = vmatprep.subr.mxu0 0.0
    %671 = vmatpush1.msra.mxu0 0.0
    %672 = vmatprep.mubr.f32.mxu0 0.0
    %673 = vmatmul.mubr.f32.gmra.mrb[0].mxu0 %v597
    %v674 = vpop.f32.mrb[0].mxu0
    %v675 = vadd.f32 %v582, %v674
    %v676 = vpop.f32.mrb[0].mxu0
    %677 = vmatprep.mubr.f32.mxu0 0.0
    %678 = vmatmul.mubr.f32.gmra.mrb[0].mxu0 %v600
    %v679 = vpop.f32.mrb[0].mxu0
    %v680 = vadd.f32 %v586, %v679
    %v681 = vpop.f32.mrb[0].mxu0
    %682 = vmatprep.mubr.f32.mxu0 0.0
    %683 = vmatmul.mubr.f32.gmra.mrb[0].mxu0 %v603
    %v684 = vpop.f32.mrb[0].mxu0
    %v685 = vadd.f32 %v590, %v684
    %v686 = vpop.f32.mrb[0].mxu0
    %687 = vmatprep.mubr.f32.mxu0 0.0
    %688 = vmatmul.mubr.f32.gmra.mrb[0].mxu0 %v606
    %v689 = vpop.f32.mrb[0].mxu0
    %v690 = vadd.f32 %v594, %v689
    %v691 = vpop.f32.mrb[0].mxu0
    %692 = vdwg.mxu0
    %v693 = vadd.f32 %v429, %v675
    %v694 = vadd.f32 %v430, %v680
    %v695 = vadd.f32 %v431, %v685
    %v696 = vadd.f32 %v432, %v690
    %v697 = vld [vmem:[%s4] sm:$0xf]
    %v698 = vld [vmem:[%s5] sm:$0xf]
    %700 = vset.pattern.permute.xlu0 0
    %701 = vperm.xlu0 %700, %v698
    %v702 = vpop.permute.xlu0 %701
    %v705 = vsel %vm194, %v697, 0
    %707 = vmatprep.subr.mxu0 0.0
    %708 = vmatpush1.msra.mxu0 %v693
    %709 = vmatprep.subr.mxu0 0.0
    %710 = vmatpush1.msra.mxu0 %v694
    %711 = vmatprep.subr.mxu0 0.0
    %712 = vmatpush1.msra.mxu0 %v695
    %713 = vmatprep.subr.mxu0 0.0
    %714 = vmatpush1.msra.mxu0 %v696
    %715 = vmatprep.subr.mxu0 0.0
    %716 = vmatpush1.msra.mxu0 0.0
    %717 = vmatprep.subr.mxu0 0.0
    %718 = vmatpush1.msra.mxu0 0.0
    %719 = vmatprep.subr.mxu0 0.0
    %720 = vmatpush1.msra.mxu0 0.0
    %721 = vmatprep.subr.mxu0 0.0
    %722 = vmatpush1.msra.mxu0 0.0
    %723 = vmatprep.subr.mxu0 0.0
    %724 = vmatpush1.msra.mxu0 0.0
    %725 = vmatprep.subr.mxu0 0.0
    %726 = vmatpush1.msra.mxu0 0.0
    %727 = vmatprep.subr.mxu0 0.0
    %728 = vmatpush1.msra.mxu0 0.0
    %729 = vmatprep.subr.mxu0 0.0
    %730 = vmatpush1.msra.mxu0 0.0
    %731 = vmatprep.subr.mxu0 0.0
    %732 = vmatpush1.msra.mxu0 0.0
    %733 = vmatprep.subr.mxu0 0.0
    %734 = vmatpush1.msra.mxu0 0.0
    %735 = vmatprep.subr.mxu0 0.0
    %736 = vmatpush1.msra.mxu0 0.0
    %737 = vmatprep.subr.mxu0 0.0
    %738 = vmatpush1.msra.mxu0 0.0
    %739 = vmatprep.subr.mxu0 0.0
    %740 = vmatpush1.msra.mxu0 0.0
    %741 = vmatprep.subr.mxu0 0.0
    %742 = vmatpush1.msra.mxu0 0.0
    %743 = vmatprep.subr.mxu0 0.0
    %744 = vmatpush1.msra.mxu0 0.0
    %745 = vmatprep.subr.mxu0 0.0
    %746 = vmatpush1.msra.mxu0 0.0
    %747 = vmatprep.subr.mxu0 0.0
    %748 = vmatpush1.msra.mxu0 0.0
    %749 = vmatprep.subr.mxu0 0.0
    %750 = vmatpush1.msra.mxu0 0.0
    %751 = vmatprep.subr.mxu0 0.0
    %752 = vmatpush1.msra.mxu0 0.0
    %753 = vmatprep.subr.mxu0 0.0
    %754 = vmatpush1.msra.mxu0 0.0
    %755 = vmatprep.subr.mxu0 0.0
    %756 = vmatpush1.msra.mxu0 0.0
    %757 = vmatprep.subr.mxu0 0.0
    %758 = vmatpush1.msra.mxu0 0.0
    %759 = vmatprep.subr.mxu0 0.0
    %760 = vmatpush1.msra.mxu0 0.0
    %761 = vmatprep.subr.mxu0 0.0
    %762 = vmatpush1.msra.mxu0 0.0
    %763 = vmatprep.subr.mxu0 0.0
    %764 = vmatpush1.msra.mxu0 0.0
    %765 = vmatprep.subr.mxu0 0.0
    %766 = vmatpush1.msra.mxu0 0.0
    %767 = vmatprep.subr.mxu0 0.0
    %768 = vmatpush1.msra.mxu0 0.0
    %769 = vmatprep.subr.mxu0 0.0
    %770 = vmatpush1.msra.mxu0 0.0
    %771 = vmatprep.mubr.f32.mxu0 0.0
    %772 = vmatmul.mubr.f32.gmra.mrb[0].mxu0 %v705
    %v773 = vpop.f32.mrb[0].mxu0
    %v774 = vadd.f32 %v702, %v773
    %v775 = vpop.f32.mrb[0].mxu0
    %776 = vdwg.mxu0
    %vm777 = vcmask 60416
    %778 = vst.msk [vmem:[#allocation5] sm:$0xf] %vm777, %v774
    // Predicated region
    $region30: #{_forward_jit.1} parent=1 // pred_check
      _
    $region31: #{_forward_jit.1} parent=1 // pred_check_branch
      %780 = sbr.rel (0) target = $region33
    $region32: #{_forward_jit.1} parent=1 // pred_region
      %s782 = ssub.s32 64, 64
      %783 = vsyncadd [#allocation4], %s782
      %s785 = sshll.u32 [#allocation5], 4
      %s786 = int_to_ptr.vmem [resolvable:$true] %s785
      %788 = dma.vmem_to_hbm [thread:$0]  %s786, 64, %s6, [#allocation4]
    $region33: #{_forward_jit.1} parent=1 // pred_fallthru
      _
    // Predicated region
    $region34: #{_forward_jit.1} parent=1 // pred_check
      _
    $region35: #{_forward_jit.1} parent=1 // pred_check_branch
      %790 = sbr.rel (0) target = $region37
    $region36: #{_forward_jit.1} parent=1 // pred_region
      %791 = dma.done [#allocation4], 64
    $region37: #{_forward_jit.1} parent=1 // pred_fallthru
      _
    %792 = vsyncpa [#allocation3], 1
    %793 = vsyncpa [#allocation4], 1

</llo_original>
